<compile_context>
chip_gen: v6e
topology: v6e:2x2x1
jax: 0.10.0
libtpu: 0.0.40
codegen_flags: <defaults>
</compile_context>

<pallas_src>
import functools

import numpy as np
import jax
import jax.numpy as jnp
from jax.experimental import pallas as pl
from jax.experimental.pallas import tpu as pltpu

BN_EPS = 1e-5
VMEM_SPEC = pl.BlockSpec(memory_space=pltpu.MemorySpace.VMEM)


# ----------------------------- Pallas kernels ------------------------------ #

def _stem_kernel(x_ref, w_ref, b_ref, o_ref, *, ho):
    # x_ref: (1, Hp, Wp*Cin) bf16   padded input, W folded into lanes
    # w_ref: (3, Wp*Cin, Wo*Cout) bf16  block-Toeplitz weights (BN scale folded)
    # b_ref: (1, Wo*Cout) f32
    acc = jnp.dot(x_ref[0, 0:ho, :], w_ref[0], preferred_element_type=jnp.float32)
    for kh in (1, 2):
        acc = acc + jnp.dot(x_ref[0, kh:kh + ho, :], w_ref[kh],
                            preferred_element_type=jnp.float32)
    o_ref[0] = jnp.maximum(acc + b_ref[...], 0.0).astype(o_ref.dtype)


def _block_kernel(x_ref, w1_ref, b1_ref, w2_ref, b2_ref, sc_ref, o_ref, hp_ref,
                  *, ho, wo, planes, strided):
    # One whole BasicBlock for one image:
    #   h   = relu(conv1(x) * bn1_scale + bn1_bias)
    #   out = relu(conv2(h) * bn2_scale + bn2_bias + shortcut)
    def tap(kh):
        if strided:
            return x_ref[0, kh]                 # pre-gathered strided rows
        return x_ref[0, kh:kh + ho, :]          # unit-stride row window

    acc1 = jnp.dot(tap(0), w1_ref[0], preferred_element_type=jnp.float32)
    for kh in (1, 2):
        acc1 = acc1 + jnp.dot(tap(kh), w1_ref[kh],
                              preferred_element_type=jnp.float32)
    h = jnp.maximum(acc1 + b1_ref[...], 0.0)    # (ho, wo*planes) f32

    # Re-pad conv1's output (pad=1 in H and W) inside VMEM for conv2.
    hp_ref[...] = jnp.zeros(hp_ref.shape, hp_ref.dtype)
    hp_ref[1:ho + 1, planes:(wo + 1) * planes] = h.astype(hp_ref.dtype)

    acc2 = jnp.dot(hp_ref[0:ho, :], w2_ref[0], preferred_element_type=jnp.float32)
    for kh in (1, 2):
        acc2 = acc2 + jnp.dot(hp_ref[kh:kh + ho, :], w2_ref[kh],
                              preferred_element_type=jnp.float32)
    y = acc2 + b2_ref[...] + sc_ref[0].astype(jnp.float32)
    o_ref[0] = jnp.maximum(y, 0.0).astype(o_ref.dtype)


def _head_kernel(x_ref, w_ref, b_ref, o_ref):
    # x: (N, HW, C) -> global average pool over HW, then linear (C, 128-padded)
    pooled = jnp.mean(x_ref[...].astype(jnp.float32), axis=1)
    o_ref[...] = (
        jnp.dot(pooled, w_ref[...], preferred_element_type=jnp.float32) + b_ref[...]
    )


# ------------------------------ JAX wrappers ------------------------------- #

def _stem(xp_fold, w, b, ho, wo, cout):
    n = xp_fold.shape[0]
    return pl.pallas_call(
        functools.partial(_stem_kernel, ho=ho),
        out_shape=jax.ShapeDtypeStruct((n, ho, wo * cout), jnp.bfloat16),
        grid=(n,),
        in_specs=[
            pl.BlockSpec((1,) + xp_fold.shape[1:], lambda i: (i, 0, 0)),
            pl.BlockSpec(w.shape, lambda i: (0, 0, 0)),
            pl.BlockSpec(b.shape, lambda i: (0, 0)),
        ],
        out_specs=pl.BlockSpec((1, ho, wo * cout), lambda i: (i, 0, 0)),
        compiler_params=pltpu.CompilerParams(dimension_semantics=("parallel",)),
    )(xp_fold, w, b)


def _run_block(act, blk, h, w):
    # act: (N, H, W*Cin) bf16, folded layout.
    n = act.shape[0]
    cin, planes, s = blk["in_planes"], blk["planes"], blk["stride"]
    ho = (h - 1) // s + 1
    wo = (w - 1) // s + 1

    # Spatial pad=1: one row top/bottom, Cin zero-lanes left/right (folded W pad).
    xp = jnp.pad(act, ((0, 0), (1, 1), (cin, cin)))
    if s == 1:
        x_in, strided = xp, False
    else:
        # Pre-gather the three strided row windows (rows 2i+kh) so the kernel
        # only needs unit-stride access.
        x_in = jnp.stack([xp[:, kh:kh + 2 * ho - 1:2, :] for kh in range(3)],
                         axis=1)
        strided = True
    idx = (lambda i: (i, 0, 0, 0)) if strided else (lambda i: (i, 0, 0))
    x_spec = pl.BlockSpec((1,) + x_in.shape[1:], idx)

    if s != 1 or cin != planes:
        # option-A shortcut: spatial ::2 subsample + zero-pad channels.
        x4 = act.reshape(n, h, w, cin)
        pad = planes // 4
        sc = jnp.pad(x4[:, ::2, ::2, :], ((0, 0), (0, 0), (0, 0), (pad, pad)))
        sc = sc.reshape(n, ho, wo * planes)
    else:
        sc = act

    out = pl.pallas_call(
        functools.partial(_block_kernel, ho=ho, wo=wo, planes=planes,
                          strided=strided),
        out_shape=jax.ShapeDtypeStruct((n, ho, wo * planes), jnp.bfloat16),
        grid=(n,),
        in_specs=[
            x_spec,
            pl.BlockSpec(blk["w1"].shape, lambda i: (0, 0, 0)),
            pl.BlockSpec(blk["b1"].shape, lambda i: (0, 0)),
            pl.BlockSpec(blk["w2"].shape, lambda i: (0, 0, 0)),
            pl.BlockSpec(blk["b2"].shape, lambda i: (0, 0)),
            pl.BlockSpec((1, ho, wo * planes), lambda i: (i, 0, 0)),
        ],
        out_specs=pl.BlockSpec((1, ho, wo * planes), lambda i: (i, 0, 0)),
        scratch_shapes=[pltpu.VMEM((ho + 2, (wo + 2) * planes), jnp.bfloat16)],
        compiler_params=pltpu.CompilerParams(dimension_semantics=("parallel",)),
    )(x_in, blk["w1"], blk["b1"], blk["w2"], blk["b2"], sc)
    return out, ho, wo, planes


def _head(x, w, b, num_classes):
    n = x.shape[0]
    out = pl.pallas_call(
        _head_kernel,
        out_shape=jax.ShapeDtypeStruct((n, w.shape[1]), jnp.float32),
        in_specs=[VMEM_SPEC] * 3,
        out_specs=VMEM_SPEC,
    )(x, w, b)
    return out[:, :num_classes]


# --------------------------- Parameter construction ------------------------ #

def _bn_fold(c):
    # Fresh nn.BatchNorm2d, eval semantics: gamma=1, beta=0, mean=0, var=1.
    gamma = jnp.ones((c,), jnp.float32)
    beta = jnp.zeros((c,), jnp.float32)
    mean = jnp.zeros((c,), jnp.float32)
    var = jnp.ones((c,), jnp.float32)
    scale = gamma / jnp.sqrt(var + BN_EPS)
    bias = beta - mean * scale
    return scale, bias


def _conv_weight(key, cin, cout):
    # kaiming_normal_: std = sqrt(2 / fan_in), fan_in = cin * 3 * 3
    return jax.random.normal(key, (3, 3, cin, cout), jnp.float32) * jnp.sqrt(
        2.0 / (cin * 9))


def _toeplitz_w(w4, scale, wp, wo, stride):
    # Fold BN scale into the weights, then lay them out as 3 block-Toeplitz
    # matrices (one per kh): (Wp*Cin) -> (Wo*Cout) acting on a folded padded row.
    # W-shift and W-stride of the 3x3 conv are absorbed into this layout.
    cin, cout = w4.shape[2], w4.shape[3]
    ws = w4 * scale[None, None, None, :]
    mats = []
    for kh in range(3):
        m = jnp.zeros((wp * cin, wo * cout), jnp.float32)
        for kw in range(3):
            sel = np.zeros((wp, wo), np.float32)
            for j in range(wo):
                sel[j * stride + kw, j] = 1.0
            m = m + jnp.kron(jnp.asarray(sel), ws[kh, kw])
        mats.append(m)
    return jnp.stack(mats, axis=0).astype(jnp.bfloat16)


def _fold_bias(bias, wo):
    # Per-channel bias tiled over the folded W positions -> (1, Wo*Cout) f32.
    return jnp.tile(bias, wo).reshape(1, -1)


def make_params(key, num_blocks=(1, 1, 1), num_classes=100, spatial=16):
    keys = iter(jax.random.split(key, 256))
    params = {"num_classes": num_classes}

    s_scale, s_bias = _bn_fold(16)
    params["stem_w"] = _toeplitz_w(_conv_weight(next(keys), 3, 16), s_scale,
                                   spatial + 2, spatial, 1)
    params["stem_b"] = _fold_bias(s_bias, spatial)

    in_planes, cur_w = 16, spatial
    layers = []
    for planes, nb, stride0 in ((16, num_blocks[0], 1),
                                (32, num_blocks[1], 2),
                                (64, num_blocks[2], 2)):
        blocks = []
        for s in [stride0] + [1] * (nb - 1):
            wo = (cur_w - 1) // s + 1
            sc1, b1 = _bn_fold(planes)
            sc2, b2 = _bn_fold(planes)
            blk = {
                "stride": s, "in_planes": in_planes, "planes": planes,
                "w1": _toeplitz_w(_conv_weight(next(keys), in_planes, planes),
                                  sc1, cur_w + 2, wo, s),
                "b1": _fold_bias(b1, wo),
                "w2": _toeplitz_w(_conv_weight(next(keys), planes, planes),
                                  sc2, wo + 2, wo, 1),
                "b2": _fold_bias(b2, wo),
            }
            blocks.append(blk)
            in_planes, cur_w = planes, wo
        layers.append(blocks)
    params["layers"] = layers

    # Linear(64, num_classes): kaiming_normal_ weight, default uniform bias.
    # Padded to 128 output lanes for a dense store; sliced back in the wrapper.
    w = jax.random.normal(next(keys), (64, num_classes), jnp.float32) * jnp.sqrt(2.0 / 64)
    bound = 1.0 / jnp.sqrt(64.0)
    b = jax.random.uniform(next(keys), (num_classes,), jnp.float32, -bound, bound)
    ncp = ((num_classes + 127) // 128) * 128
    params["linear_w"] = jnp.zeros((64, ncp), jnp.float32).at[:, :num_classes].set(w)
    params["linear_b"] = jnp.zeros((1, ncp), jnp.float32).at[:, :num_classes].set(b)
    return params


# --------------------------------- Forward --------------------------------- #

def resnet_rotated_f_forward(params, x_nchw):
    # PyTorch input layout is NCHW -> NHWC -> folded (N, H, W*C) for the kernels.
    x = jnp.transpose(x_nchw, (0, 2, 3, 1)).astype(jnp.float32)
    n, h, w, c = x.shape
    xp = jnp.pad(x, ((0, 0), (1, 1), (1, 1), (0, 0)))
    xp = xp.reshape(n, h + 2, (w + 2) * c).astype(jnp.bfloat16)

    act = _stem(xp, params["stem_w"], params["stem_b"], h, w, 16)
    cur_h, cur_w, cur_c = h, w, 16
    for layer in params["layers"]:
        for blk in layer:
            act, cur_h, cur_w, cur_c = _run_block(act, blk, cur_h, cur_w)

    xh = act.reshape(n, cur_h, cur_w, cur_c).reshape(n, cur_h * cur_w, cur_c)
    xh = xh.astype(jnp.float32)
    return _head(xh, params["linear_w"], params["linear_b"], params["num_classes"])


# ----------------------------------- Main ----------------------------------- #

if __name__ == "__main__":
    key = jax.random.PRNGKey(0)
    k_param, k_x = jax.random.split(key)

    # Small, forward-consistent shapes: batch=2, 3 input channels, 16x16 spatial.
    x = jax.random.normal(k_x, (2, 3, 16, 16), jnp.float32)
    params = make_params(k_param, num_blocks=(1, 1, 1), num_classes=100, spatial=16)

    out = resnet_rotated_f_forward(params, x)
    out = jax.block_until_ready(out)
    assert out.shape == (2, 100), out.shape
    print("KERNEL_OK")
</pallas_src>

<mosaic_0001>
module attributes {stable_mosaic.version = 11 : i64} {
  func.func @_stem_kernel(%arg0: i32, %arg1: memref<1x18x54xbf16, #tpu.memory_space<vmem>>, %arg2: memref<3x54x256xbf16, #tpu.memory_space<vmem>>, %arg3: memref<1x256xf32, #tpu.memory_space<vmem>>, %arg4: memref<1x16x256xbf16, #tpu.memory_space<vmem>>) attributes {dimension_semantics = [#tpu.dimension_semantics<parallel>], iteration_bounds = array<i64: 2>, scalar_prefetch = 0 : i64, scratch_operands = 0 : i64, tpu.core_type = #tpu.core_type<tc>, window_params = [{transform_indices = @transform_0, window_bounds = array<i64: 1, 18, 54>}, {pipeline_mode = #tpu.pipeline_mode<synchronous>, transform_indices = @transform_1, window_bounds = array<i64: 3, 54, 256>}, {pipeline_mode = #tpu.pipeline_mode<synchronous>, transform_indices = @transform_2, window_bounds = array<i64: 1, 256>}, {transform_indices = @transform_3, window_bounds = array<i64: 1, 16, 256>}]} {
    %c0 = arith.constant 0 : index
    %c0_0 = arith.constant 0 : index
    %c0_1 = arith.constant 0 : index
    %0 = vector.load %arg1[%c0, %c0_0, %c0_1] : memref<1x18x54xbf16, #tpu.memory_space<vmem>>, vector<1x16x54xbf16>
    %1 = vector.shape_cast %0 : vector<1x16x54xbf16> to vector<16x54xbf16>
    %c0_2 = arith.constant 0 : index
    %c0_3 = arith.constant 0 : index
    %c0_4 = arith.constant 0 : index
    %2 = vector.load %arg2[%c0_2, %c0_3, %c0_4] : memref<3x54x256xbf16, #tpu.memory_space<vmem>>, vector<1x54x256xbf16>
    %3 = vector.shape_cast %2 : vector<1x54x256xbf16> to vector<54x256xbf16>
    %cst = arith.constant dense<0.000000e+00> : vector<16x256xf32>
    %4 = tpu.matmul %1, %3, %cst {dimension_numbers = #tpu.dot_dimension_numbers<[1], [0], [0], [1], [0, 0, 1, 1], [], []>} : vector<16x54xbf16>, vector<54x256xbf16>, vector<16x256xf32> -> vector<16x256xf32>
    %c0_5 = arith.constant 0 : index
    %c1 = arith.constant 1 : index
    %c0_6 = arith.constant 0 : index
    %5 = vector.load %arg1[%c0_5, %c1, %c0_6] : memref<1x18x54xbf16, #tpu.memory_space<vmem>>, vector<1x16x54xbf16>
    %6 = vector.shape_cast %5 : vector<1x16x54xbf16> to vector<16x54xbf16>
    %c1_7 = arith.constant 1 : index
    %c0_8 = arith.constant 0 : index
    %c0_9 = arith.constant 0 : index
    %7 = vector.load %arg2[%c1_7, %c0_8, %c0_9] : memref<3x54x256xbf16, #tpu.memory_space<vmem>>, vector<1x54x256xbf16>
    %8 = vector.shape_cast %7 : vector<1x54x256xbf16> to vector<54x256xbf16>
    %cst_10 = arith.constant dense<0.000000e+00> : vector<16x256xf32>
    %9 = tpu.matmul %6, %8, %cst_10 {dimension_numbers = #tpu.dot_dimension_numbers<[1], [0], [0], [1], [0, 0, 1, 1], [], []>} : vector<16x54xbf16>, vector<54x256xbf16>, vector<16x256xf32> -> vector<16x256xf32>
    %10 = arith.addf %4, %9 : vector<16x256xf32>
    %c0_11 = arith.constant 0 : index
    %c2 = arith.constant 2 : index
    %c0_12 = arith.constant 0 : index
    %11 = vector.load %arg1[%c0_11, %c2, %c0_12] : memref<1x18x54xbf16, #tpu.memory_space<vmem>>, vector<1x16x54xbf16>
    %12 = vector.shape_cast %11 : vector<1x16x54xbf16> to vector<16x54xbf16>
    %c2_13 = arith.constant 2 : index
    %c0_14 = arith.constant 0 : index
    %c0_15 = arith.constant 0 : index
    %13 = vector.load %arg2[%c2_13, %c0_14, %c0_15] : memref<3x54x256xbf16, #tpu.memory_space<vmem>>, vector<1x54x256xbf16>
    %14 = vector.shape_cast %13 : vector<1x54x256xbf16> to vector<54x256xbf16>
    %cst_16 = arith.constant dense<0.000000e+00> : vector<16x256xf32>
    %15 = tpu.matmul %12, %14, %cst_16 {dimension_numbers = #tpu.dot_dimension_numbers<[1], [0], [0], [1], [0, 0, 1, 1], [], []>} : vector<16x54xbf16>, vector<54x256xbf16>, vector<16x256xf32> -> vector<16x256xf32>
    %16 = arith.addf %10, %15 : vector<16x256xf32>
    %c0_17 = arith.constant 0 : index
    %c0_18 = arith.constant 0 : index
    %17 = vector.load %arg3[%c0_17, %c0_18] : memref<1x256xf32, #tpu.memory_space<vmem>>, vector<1x256xf32>
    %18 = vector.broadcast %17 : vector<1x256xf32> to vector<16x256xf32>
    %19 = arith.addf %16, %18 : vector<16x256xf32>
    %cst_19 = arith.constant 0.000000e+00 : f32
    %20 = vector.broadcast %cst_19 : f32 to vector<16x256xf32>
    %21 = arith.maximumf %19, %20 : vector<16x256xf32>
    %22 = arith.truncf %21 : vector<16x256xf32> to vector<16x256xbf16>
    %c0_20 = arith.constant 0 : index
    %c0_21 = arith.constant 0 : index
    %c0_22 = arith.constant 0 : index
    %23 = vector.load %arg4[%c0_20, %c0_21, %c0_22] : memref<1x16x256xbf16, #tpu.memory_space<vmem>>, vector<1x16x256xbf16>
    %24 = vector.shape_cast %23 : vector<1x16x256xbf16> to vector<16x256xbf16>
    %25 = vector.shape_cast %22 : vector<16x256xbf16> to vector<1x16x256xbf16>
    tpu.vector_store %arg4[%c0_20, %c0_21, %c0_22], %25 {strides = array<i32>} : memref<1x16x256xbf16, #tpu.memory_space<vmem>>, vector<1x16x256xbf16>,
    return
  }
  func.func @transform_0(%arg0: i32) -> (i32, i32, i32) {
    %c0_i32 = arith.constant 0 : i32
    %c0_i32_0 = arith.constant 0 : i32
    %c0_i32_1 = arith.constant 0 : i32
    return %arg0, %c0_i32, %c0_i32_0 : i32, i32, i32
  }
  func.func @transform_1(%arg0: i32) -> (i32, i32, i32) {
    %c0_i32 = arith.constant 0 : i32
    %c0_i32_0 = arith.constant 0 : i32
    %c0_i32_1 = arith.constant 0 : i32
    %c0_i32_2 = arith.constant 0 : i32
    return %c0_i32, %c0_i32_0, %c0_i32_1 : i32, i32, i32
  }
  func.func @transform_2(%arg0: i32) -> (i32, i32) {
    %c0_i32 = arith.constant 0 : i32
    %c0_i32_0 = arith.constant 0 : i32
    %c0_i32_1 = arith.constant 0 : i32
    return %c0_i32, %c0_i32_0 : i32, i32
  }
  func.func @transform_3(%arg0: i32) -> (i32, i32, i32) {
    %c0_i32 = arith.constant 0 : i32
    %c0_i32_0 = arith.constant 0 : i32
    %c0_i32_1 = arith.constant 0 : i32
    return %arg0, %c0_i32, %c0_i32_0 : i32, i32, i32
  }
}

</mosaic_0001>

<llo_original>
// kernel: tpu_custom_call.1
$region0: #{tpu_custom_call.1}
  #allocation0 [shape = 'u32[]', space=smem, size = 0x4, offset = 0x4, fixed_abs, tag = 'smem constant byte address 0x4 - core index']
  #allocation1 [shape = 'u32[144,128]{1,0:T(1,128)}', space=vmem, size = 0x12000, scoped, tag = 'internal scratch']
  %s0 = inlined_call_operand.vmem [shape: bf16[2,18,54], index: 0, kind: input, shape index: {}]
  %s1 = inlined_call_operand.hbm [shape: bf16[3,54,256], index: 1, kind: input, shape index: {}]
  %s2 = inlined_call_operand.vmem [shape: f32[1,256], index: 2, kind: input, shape index: {}]
  %s3 = inlined_call_operand.hbm [shape: bf16[2,16,256], index: 3, kind: output, shape index: {}]
  %s4 = sld [smem:[#allocation0]]
  $region49: #{tpu_custom_call.1} parent=0
    _
  %s6 = ssub.s32 1, %s4
  %s7 = scalar_select 0, %s6, %s4
  $region1: #{tpu_custom_call.1} parent=0
    #allocation2 [shape = 'u8[86016]{0}', space=vmem, size = 0x15000, scoped, tag = 'input window, operand 1, single buffered']
    #allocation3 [shape = 's32[2]{0}', space=sflag, size = 0x8, scoped, tag = 'scoped memory for tpu_custom_call.1']
    #allocation4 [shape = 's32[2]{0}', space=sflag, size = 0x8, scoped, tag = 'scoped memory for tpu_custom_call.1']
    #allocation5 [shape = 'u8[16384]{0}', space=vmem, size = 0x4000, scoped, tag = 'output window, operand 0']
    %8 = vsyncpa [#allocation3], 0
    %9 = vsyncpa [#allocation4], 0
    %s10 = scalar_lea.sflag [#allocation4], 1
    %11 = vsyncpa %s10, 0
    loop: start=0, step=1, limit=4
    $region2: #{tpu_custom_call.1} parent=1 // loop_pre_header
      _
    $region3: #{tpu_custom_call.1} parent=1 // loop_header
      %s13 = sphi 0, %s17
      %p14 = scmp.ge.s32.totalorder %s13, 4
      %s23 = sphi 0, %s25
      %s26 = sphi 0, %s23
      %s27 = sphi 0, %s26
      %s43 = sphi 0, %s27
      %s47 = sphi 0, %s47
      %s49 = sphi 0, %s47
      %s50 = sphi 0, %s49
      %s64 = sphi 0, %s50
      %s68 = sphi 0, %s68
      %s70 = sphi 0, %s68
      %s71 = sphi 0, %s70
      %s85 = sphi 0, %s71
      %s91 = sphi 0, %s93
      %s94 = sphi 0, %s91
      %s95 = sphi 0, %s94
      %s111 = sphi 0, %s95
    $region4: #{tpu_custom_call.1} parent=1 // loop_header_branch
      %16 = sbr.rel (%p14) target = $region8
    $region5: #{tpu_custom_call.1} parent=1 // loop_body
      %s18 = ssub.s32 %s13, 1
      %s19 = ssub.s32 %s13, 2
      %s20 = sadd.s32 %s13, 1
      %s21 = ssub.s32 %s13, %s20
      %p22 = scmp.eq.s32.totalorder %s21, 0
      %s24 = sadd.s32 %s23, 1
      %s25 = scalar_select %p22, %s23, %s24
      %p28 = pneg %p22
      %p29 = scmp.eq.s32.totalorder %s13, 1
      %p30 = por %p28, %p29
      %p31 = scmp.ne.s32.totalorder %s23, %s26
      %p32 = scmp.eq.s32.totalorder %s13, 0
      %p33 = por %p31, %p32
      %p34 = scmp.ne.s32.totalorder %s23, %s26
      %p35 = scmp.eq.s32.totalorder %s18, 1
      %p36 = por %p34, %p35
      %p37 = scmp.ne.s32.totalorder %s26, %s27
      %p38 = scmp.eq.s32.totalorder %s18, 0
      %p39 = por %p37, %p38
      %p40 = scmp.ne.s32.totalorder %s26, %s27
      %p41 = scmp.eq.s32.totalorder %s19, 1
      %p42 = por %p40, %p41
      %p44 = scmp.ne.s32.totalorder %s27, %s43
      %p45 = scmp.eq.s32.totalorder %s19, 0
      %p46 = por %p44, %p45
      %s48 = sadd.s32 %s47, 1
      %p51 = scmp.eq.s32.totalorder %s13, 1
      %p52 = scmp.ne.s32.totalorder %s47, %s49
      %p53 = scmp.eq.s32.totalorder %s13, 0
      %p54 = por %p52, %p53
      %p55 = scmp.ne.s32.totalorder %s47, %s49
      %p56 = scmp.eq.s32.totalorder %s18, 1
      %p57 = por %p55, %p56
      %p58 = scmp.ne.s32.totalorder %s49, %s50
      %p59 = scmp.eq.s32.totalorder %s18, 0
      %p60 = por %p58, %p59
      %p61 = scmp.ne.s32.totalorder %s49, %s50
      %p62 = scmp.eq.s32.totalorder %s19, 1
      %p63 = por %p61, %p62
      %p65 = scmp.ne.s32.totalorder %s50, %s64
      %p66 = scmp.eq.s32.totalorder %s19, 0
      %p67 = por %p65, %p66
      %s69 = sadd.s32 %s68, 1
      %p72 = scmp.eq.s32.totalorder %s13, 1
      %p73 = scmp.ne.s32.totalorder %s68, %s70
      %p74 = scmp.eq.s32.totalorder %s13, 0
      %p75 = por %p73, %p74
      %p76 = scmp.ne.s32.totalorder %s68, %s70
      %p77 = scmp.eq.s32.totalorder %s18, 1
      %p78 = por %p76, %p77
      %p79 = scmp.ne.s32.totalorder %s70, %s71
      %p80 = scmp.eq.s32.totalorder %s18, 0
      %p81 = por %p79, %p80
      %p82 = scmp.ne.s32.totalorder %s70, %s71
      %p83 = scmp.eq.s32.totalorder %s19, 1
      %p84 = por %p82, %p83
      %p86 = scmp.ne.s32.totalorder %s71, %s85
      %p87 = scmp.eq.s32.totalorder %s19, 0
      %p88 = por %p86, %p87
      %s89 = ssub.s32 %s13, %s20
      %p90 = scmp.eq.s32.totalorder %s89, 0
      %s92 = sadd.s32 %s91, 1
      %s93 = scalar_select %p90, %s91, %s92
      %p96 = pneg %p90
      %p97 = scmp.eq.s32.totalorder %s13, 1
      %p98 = por %p96, %p97
      %p99 = scmp.ne.s32.totalorder %s91, %s94
      %p100 = scmp.eq.s32.totalorder %s13, 0
      %p101 = por %p99, %p100
      %p102 = scmp.ne.s32.totalorder %s91, %s94
      %p103 = scmp.eq.s32.totalorder %s18, 1
      %p104 = por %p102, %p103
      %p105 = scmp.ne.s32.totalorder %s94, %s95
      %p106 = scmp.eq.s32.totalorder %s18, 0
      %p107 = por %p105, %p106
      %p108 = scmp.ne.s32.totalorder %s94, %s95
      %p109 = scmp.eq.s32.totalorder %s19, 1
      %p110 = por %p108, %p109
      %p112 = scmp.ne.s32.totalorder %s95, %s111
      %p113 = scmp.eq.s32.totalorder %s19, 0
      %p114 = por %p112, %p113
      %p115 = scmp.le.s32.totalorder 1, %s13
      %p116 = scmp.lt.s32.totalorder %s13, 3
      %p117 = pnand %p115, %p116
      %p118 = pneg %p117
      // Predicated region
      $region9: #{tpu_custom_call.1} parent=5 // pred_check
        _
      $region10: #{tpu_custom_call.1} parent=5 // pred_check_branch
        %120 = sbr.rel (%p117) target = $region12
      $region11: #{tpu_custom_call.1} parent=5 // pred_region
        %s121 = ssub.s32 %s13, 1
        // Predicated region
        $region13: #{tpu_custom_call.1} parent=11 // pred_check
          %p122 = pneg %p60
        $region14: #{tpu_custom_call.1} parent=11 // pred_check_branch
          %124 = sbr.rel (%p122) target = $region16
        $region15: #{tpu_custom_call.1} parent=11 // pred_region
          %s126 = ssub.s32 2688, 2688
          %127 = vsyncadd [#allocation3], %s126
          %s128 = sshll.u32 [#allocation2], 4
          %s129 = int_to_ptr.vmem [resolvable:$true] %s128
          %134 = dma.hbm_to_vmem [thread:$0]  %s1, 2688, %s129, [#allocation3], 128, 128, 8
        $region16: #{tpu_custom_call.1} parent=11 // pred_fallthru
          _
        // Predicated region
        $region17: #{tpu_custom_call.1} parent=11 // pred_check
          %p135 = pneg %p81
        $region18: #{tpu_custom_call.1} parent=11 // pred_check_branch
          %137 = sbr.rel (%p135) target = $region20
        $region19: #{tpu_custom_call.1} parent=11 // pred_region
          _
        $region20: #{tpu_custom_call.1} parent=11 // pred_fallthru
          _
      $region12: #{tpu_custom_call.1} parent=5 // pred_fallthru
        _
      %p138 = scmp.lt.s32.totalorder %s13, 2
      // Predicated region
      $region21: #{tpu_custom_call.1} parent=5 // pred_check
        %p139 = pneg %p138
      $region22: #{tpu_custom_call.1} parent=5 // pred_check_branch
        %141 = sbr.rel (%p139) target = $region24
      $region23: #{tpu_custom_call.1} parent=5 // pred_region
        // Predicated region
        $region25: #{tpu_custom_call.1} parent=23 // pred_check
          %p142 = pneg %p33
        $region26: #{tpu_custom_call.1} parent=23 // pred_check_branch
          %144 = sbr.rel (%p142) target = $region28
        $region27: #{tpu_custom_call.1} parent=23 // pred_region
          %p145 = scmp.lt.s32.totalorder %s13, 1
          %s146 = scalar_select %p145, %s13, 1
          %s147 = smul.addr %s146, 3
          %s148 = smul.addr %s147, 4
          %s149 = scalar_lea.vmem %s0, %s148
        $region28: #{tpu_custom_call.1} parent=23 // pred_fallthru
          _
      $region24: #{tpu_custom_call.1} parent=5 // pred_fallthru
        _
      %p150 = scmp.le.s32.totalorder 1, %s13
      %p151 = scmp.lt.s32.totalorder %s13, 3
      %p152 = pnand %p150, %p151
      %p153 = pneg %p152
      // Predicated region
      $region29: #{tpu_custom_call.1} parent=5 // pred_check
        _
      $region30: #{tpu_custom_call.1} parent=5 // pred_check_branch
        %155 = sbr.rel (%p152) target = $region32
      $region31: #{tpu_custom_call.1} parent=5 // pred_region
        %s156 = ssub.s32 %s13, 1
        // Predicated region
        $region33: #{tpu_custom_call.1} parent=31 // pred_check
          %p157 = pneg %p60
        $region34: #{tpu_custom_call.1} parent=31 // pred_check_branch
          %159 = sbr.rel (%p157) target = $region36
        $region35: #{tpu_custom_call.1} parent=31 // pred_region
          %160 = dma.done [#allocation3], 2688
        $region36: #{tpu_custom_call.1} parent=31 // pred_fallthru
          _
        %p161 = scmp.lt.s32.totalorder %s18, 1
        %s162 = scalar_select %p161, %s18, 1
        %s163 = smul.addr %s162, 3
        %s164 = smul.addr %s163, 4
        %s165 = scalar_lea.vmem %s0, %s164
        %p166 = pneg %p39
        %p167 = pneg %p36
        %p168 = pneg %p60
        %p169 = pneg %p57
        %p170 = pneg %p81
        %p171 = pneg %p78
        %p172 = pneg %p107
        %p173 = pneg %p104
        %s174 = sand.u32 %s94, 1
        %s175 = scalar_lea.sflag [#allocation4], %s174
        %s176 = sand.u32 %s94, 1
        %s177 = smul.addr %s176, 16
        %s178 = scalar_lea.vmem [#allocation5], %s177
        %p179 = scmp.lt.s32.totalorder %s18, 1
        %s180 = scalar_select %p179, %s18, 1
        %s181 = smul.addr %s180, 3
        %s182 = smul.addr %s181, 4
        %s183 = scalar_lea.vmem %s0, %s182
        %v185 = vld [vmem:[%s183] sm:$0xf]
        %v186 = vld [vmem:[%s183 + $0x4] sm:$0xf]
        %v187 = vld [vmem:[#allocation2] sm:$0xff]
        %v188 = vld [vmem:[#allocation2 + $0x8] sm:$0xff]
        %v189 = vld [vmem:[#allocation2 + $0x10] sm:$0xff]
        %v190 = vld [vmem:[#allocation2 + $0x18] sm:$0xff]
        %v191 = vld [vmem:[#allocation2 + $0x20] sm:$0xff]
        %v192 = vld [vmem:[#allocation2 + $0x28] sm:$0xff]
        %v193 = vld [vmem:[#allocation2 + $0x30] sm:$0x77]
        %v194 = vld [vmem:[%s183 + $0x8] sm:$0x1]
        %s195 = scalar_lea.vmem [#allocation2], 56
        %v196 = vld [vmem:[%s195] sm:$0xff]
        %v197 = vld [vmem:[%s195 + $0x8] sm:$0xff]
        %v198 = vld [vmem:[%s195 + $0x10] sm:$0xff]
        %v199 = vld [vmem:[%s195 + $0x18] sm:$0xff]
        %v200 = vld [vmem:[%s195 + $0x20] sm:$0xff]
        %v201 = vld [vmem:[%s195 + $0x28] sm:$0xff]
        %v202 = vld [vmem:[%s195 + $0x30] sm:$0x77]
        %v206 = vunpack.c.l.b16 %v185
        %v207 = vunpack.c.l.b16 %v186
        %v208 = vunpack.c.l.b16 %v194
        %v209 = vpack.c.b16 %v207, %v206
        %v210 = vpack.c.b16 %v208, %v208
        %vm211 = vsmask.f32 7424
        %v213 = vshrl.u32 %v209, 16
        %v215 = vshll.u32 %v209, 16
        %v217 = vrot.slane %v215, 1
        %v218 = vor.u32 %v213, %v217
        %v220 = vshll.u32 %v210, 16
        %v222 = vrot.slane %v220, 1
        %v223 = vsel %vm211, %v218, %v222
        %v231 = vunpack.c.l.b16 %v196
        %v232 = vunpack.c.h.b16 %v196
        %v233 = vunpack.c.l.b16 %v197
        %v234 = vunpack.c.h.b16 %v197
        %v235 = vunpack.c.l.b16 %v198
        %v236 = vunpack.c.h.b16 %v198
        %v237 = vunpack.c.l.b16 %v199
        %v238 = vunpack.c.h.b16 %v199
        %v239 = vunpack.c.l.b16 %v200
        %v240 = vunpack.c.h.b16 %v200
        %v241 = vunpack.c.l.b16 %v201
        %v242 = vunpack.c.h.b16 %v201
        %v243 = vunpack.c.l.b16 %v202
        %v244 = vunpack.c.h.b16 %v202
        %v245 = vpack.c.b16 %v233, %v231
        %v246 = vpack.c.b16 %v234, %v232
        %v247 = vpack.c.b16 %v237, %v235
        %v248 = vpack.c.b16 %v238, %v236
        %v249 = vpack.c.b16 %v241, %v239
        %v250 = vpack.c.b16 %v242, %v240
        %v251 = vpack.c.b16 %v243, %v243
        %v252 = vpack.c.b16 %v244, %v244
        %vm259 = vcmask 441344
        %v261 = vsel %vm259, %v223, 0
        %vm263 = vcmask 1042432
        %v265 = vsel %vm263, %v251, 0
        %v268 = vsel %vm263, %v252, 0
        %270 = vmatprep.subr.bf16.mxu0 0
        %271 = vmatpush1.bf16.msra.mxu0 0
        %272 = vmatprep.subr.bf16.mxu0 0
        %273 = vmatpush1.bf16.msra.mxu0 0
        %274 = vmatprep.subr.bf16.mxu0 0
        %275 = vmatpush1.bf16.msra.mxu0 0
        %276 = vmatprep.subr.bf16.mxu0 0
        %277 = vmatpush1.bf16.msra.mxu0 0
        %278 = vmatprep.subr.bf16.mxu0 %v268
        %279 = vmatpush1.bf16.msra.mxu0 %v265
        %280 = vmatprep.subr.bf16.mxu0 %v250
        %281 = vmatpush1.bf16.msra.mxu0 %v249
        %282 = vmatprep.subr.bf16.mxu0 %v248
        %283 = vmatpush1.bf16.msra.mxu0 %v247
        %284 = vmatprep.subr.bf16.mxu0 %v246
        %285 = vmatpush1.bf16.msra.mxu0 %v245
        %286 = vmatprep.subr.bf16.mxu0 0
        %287 = vmatpush2.bf16.msra.mxu0 0
        %288 = vmatprep.subr.bf16.mxu0 0
        %289 = vmatpush2.bf16.msra.mxu0 0
        %290 = vmatprep.subr.bf16.mxu0 0
        %291 = vmatpush2.bf16.msra.mxu0 0
        %292 = vmatprep.subr.bf16.mxu0 0
        %293 = vmatpush2.bf16.msra.mxu0 0
        %294 = vmatprep.subr.bf16.mxu0 0
        %295 = vmatpush2.bf16.msra.mxu0 0
        %296 = vmatprep.subr.bf16.mxu0 0
        %297 = vmatpush2.bf16.msra.mxu0 0
        %298 = vmatprep.subr.bf16.mxu0 0
        %299 = vmatpush2.bf16.msra.mxu0 0
        %300 = vmatprep.subr.bf16.mxu0 0
        %301 = vmatpush2.bf16.msra.mxu0 0
        %302 = vmatprep.mubr.bf16.mxu0 0
        %303 = vmatmul.mubr.bf16.gmra.mxu0 %v261
        %v304 = vpop.f32.mrf.mxu0
        %v305 = vadd.f32 0.0, %v304
        %v306 = vpop.f32.mrf.mxu0
        %v307 = vadd.f32 0.0, %v306
        %v308 = vpop.f32.mrf.mxu0
        %v309 = vadd.f32 0.0, %v308
        %v310 = vpop.f32.mrf.mxu0
        %v311 = vadd.f32 0.0, %v310
        %312 = vdwg.mxu0
        %v320 = vunpack.c.l.b16 %v187
        %v321 = vunpack.c.h.b16 %v187
        %v322 = vunpack.c.l.b16 %v188
        %v323 = vunpack.c.h.b16 %v188
        %v324 = vunpack.c.l.b16 %v189
        %v325 = vunpack.c.h.b16 %v189
        %v326 = vunpack.c.l.b16 %v190
        %v327 = vunpack.c.h.b16 %v190
        %v328 = vunpack.c.l.b16 %v191
        %v329 = vunpack.c.h.b16 %v191
        %v330 = vunpack.c.l.b16 %v192
        %v331 = vunpack.c.h.b16 %v192
        %v332 = vunpack.c.l.b16 %v193
        %v333 = vunpack.c.h.b16 %v193
        %v334 = vpack.c.b16 %v322, %v320
        %v335 = vpack.c.b16 %v323, %v321
        %v336 = vpack.c.b16 %v326, %v324
        %v337 = vpack.c.b16 %v327, %v325
        %v338 = vpack.c.b16 %v330, %v328
        %v339 = vpack.c.b16 %v331, %v329
        %v340 = vpack.c.b16 %v332, %v332
        %v341 = vpack.c.b16 %v333, %v333
        %v348 = vsel %vm259, %v209, 0
        %v351 = vsel %vm263, %v340, 0
        %v354 = vsel %vm263, %v341, 0
        %356 = vmatprep.subr.bf16.mxu0 0
        %357 = vmatpush1.bf16.msra.mxu0 0
        %358 = vmatprep.subr.bf16.mxu0 0
        %359 = vmatpush1.bf16.msra.mxu0 0
        %360 = vmatprep.subr.bf16.mxu0 0
        %361 = vmatpush1.bf16.msra.mxu0 0
        %362 = vmatprep.subr.bf16.mxu0 0
        %363 = vmatpush1.bf16.msra.mxu0 0
        %364 = vmatprep.subr.bf16.mxu0 %v354
        %365 = vmatpush1.bf16.msra.mxu0 %v351
        %366 = vmatprep.subr.bf16.mxu0 %v339
        %367 = vmatpush1.bf16.msra.mxu0 %v338
        %368 = vmatprep.subr.bf16.mxu0 %v337
        %369 = vmatpush1.bf16.msra.mxu0 %v336
        %370 = vmatprep.subr.bf16.mxu0 %v335
        %371 = vmatpush1.bf16.msra.mxu0 %v334
        %372 = vmatprep.subr.bf16.mxu0 0
        %373 = vmatpush2.bf16.msra.mxu0 0
        %374 = vmatprep.subr.bf16.mxu0 0
        %375 = vmatpush2.bf16.msra.mxu0 0
        %376 = vmatprep.subr.bf16.mxu0 0
        %377 = vmatpush2.bf16.msra.mxu0 0
        %378 = vmatprep.subr.bf16.mxu0 0
        %379 = vmatpush2.bf16.msra.mxu0 0
        %380 = vmatprep.subr.bf16.mxu0 0
        %381 = vmatpush2.bf16.msra.mxu0 0
        %382 = vmatprep.subr.bf16.mxu0 0
        %383 = vmatpush2.bf16.msra.mxu0 0
        %384 = vmatprep.subr.bf16.mxu0 0
        %385 = vmatpush2.bf16.msra.mxu0 0
        %386 = vmatprep.subr.bf16.mxu0 0
        %387 = vmatpush2.bf16.msra.mxu0 0
        %388 = vmatprep.mubr.bf16.mxu0 0
        %389 = vmatmul.mubr.bf16.gmra.mxu0 %v348
        %v390 = vpop.f32.mrf.mxu0
        %v391 = vadd.f32 %v305, %v390
        %v392 = vpop.f32.mrf.mxu0
        %v393 = vadd.f32 %v307, %v392
        %v394 = vpop.f32.mrf.mxu0
        %v395 = vadd.f32 %v309, %v394
        %v396 = vpop.f32.mrf.mxu0
        %v397 = vadd.f32 %v311, %v396
        %398 = vdwg.mxu0
        %v399 = vld [vmem:[%s183] sm:$0xe]
        %s400 = scalar_lea.vmem [#allocation2], 112
        %v401 = vld [vmem:[%s400] sm:$0xff]
        %v402 = vld [vmem:[%s400 + $0x8] sm:$0xff]
        %v403 = vld [vmem:[%s400 + $0x10] sm:$0xff]
        %v404 = vld [vmem:[%s400 + $0x18] sm:$0xff]
        %v405 = vld [vmem:[%s400 + $0x20] sm:$0xff]
        %v406 = vld [vmem:[%s400 + $0x28] sm:$0xff]
        %v407 = vld [vmem:[%s400 + $0x30] sm:$0x77]
        %v409 = vunpack.c.l.b16 %v399
        %v410 = vpack.c.b16 %v207, %v409
        %vm411 = vcmask 1046528
        %v412 = vrot.slane %v410, 1
        %v413 = vrot.slane %v210, 1
        %v414 = vsel %vm411, %v412, %v413
        %v422 = vunpack.c.l.b16 %v401
        %v423 = vunpack.c.h.b16 %v401
        %v424 = vunpack.c.l.b16 %v402
        %v425 = vunpack.c.h.b16 %v402
        %v426 = vunpack.c.l.b16 %v403
        %v427 = vunpack.c.h.b16 %v403
        %v428 = vunpack.c.l.b16 %v404
        %v429 = vunpack.c.h.b16 %v404
        %v430 = vunpack.c.l.b16 %v405
        %v431 = vunpack.c.h.b16 %v405
        %v432 = vunpack.c.l.b16 %v406
        %v433 = vunpack.c.h.b16 %v406
        %v434 = vunpack.c.l.b16 %v407
        %v435 = vunpack.c.h.b16 %v407
        %v436 = vpack.c.b16 %v424, %v422
        %v437 = vpack.c.b16 %v425, %v423
        %v438 = vpack.c.b16 %v428, %v426
        %v439 = vpack.c.b16 %v429, %v427
        %v440 = vpack.c.b16 %v432, %v430
        %v441 = vpack.c.b16 %v433, %v431
        %v442 = vpack.c.b16 %v434, %v434
        %v443 = vpack.c.b16 %v435, %v435
        %v451 = vsel %vm259, %v414, 0
        %v454 = vsel %vm263, %v442, 0
        %v457 = vsel %vm263, %v443, 0
        %459 = vmatprep.subr.bf16.mxu0 0
        %460 = vmatpush1.bf16.msra.mxu0 0
        %461 = vmatprep.subr.bf16.mxu0 0
        %462 = vmatpush1.bf16.msra.mxu0 0
        %463 = vmatprep.subr.bf16.mxu0 0
        %464 = vmatpush1.bf16.msra.mxu0 0
        %465 = vmatprep.subr.bf16.mxu0 0
        %466 = vmatpush1.bf16.msra.mxu0 0
        %467 = vmatprep.subr.bf16.mxu0 %v457
        %468 = vmatpush1.bf16.msra.mxu0 %v454
        %469 = vmatprep.subr.bf16.mxu0 %v441
        %470 = vmatpush1.bf16.msra.mxu0 %v440
        %471 = vmatprep.subr.bf16.mxu0 %v439
        %472 = vmatpush1.bf16.msra.mxu0 %v438
        %473 = vmatprep.subr.bf16.mxu0 %v437
        %474 = vmatpush1.bf16.msra.mxu0 %v436
        %475 = vmatprep.subr.bf16.mxu0 0
        %476 = vmatpush2.bf16.msra.mxu0 0
        %477 = vmatprep.subr.bf16.mxu0 0
        %478 = vmatpush2.bf16.msra.mxu0 0
        %479 = vmatprep.subr.bf16.mxu0 0
        %480 = vmatpush2.bf16.msra.mxu0 0
        %481 = vmatprep.subr.bf16.mxu0 0
        %482 = vmatpush2.bf16.msra.mxu0 0
        %483 = vmatprep.subr.bf16.mxu0 0
        %484 = vmatpush2.bf16.msra.mxu0 0
        %485 = vmatprep.subr.bf16.mxu0 0
        %486 = vmatpush2.bf16.msra.mxu0 0
        %487 = vmatprep.subr.bf16.mxu0 0
        %488 = vmatpush2.bf16.msra.mxu0 0
        %489 = vmatprep.subr.bf16.mxu0 0
        %490 = vmatpush2.bf16.msra.mxu0 0
        %491 = vmatprep.mubr.bf16.mxu0 0
        %492 = vmatmul.mubr.bf16.gmra.mxu0 %v451
        %v493 = vpop.f32.mrf.mxu0
        %v494 = vadd.f32 0.0, %v493
        %v495 = vpop.f32.mrf.mxu0
        %v496 = vadd.f32 0.0, %v495
        %v497 = vpop.f32.mrf.mxu0
        %v498 = vadd.f32 0.0, %v497
        %v499 = vpop.f32.mrf.mxu0
        %v500 = vadd.f32 0.0, %v499
        %501 = vdwg.mxu0
        %v502 = vadd.f32 %v391, %v494
        %v503 = vadd.f32 %v393, %v496
        %v504 = vadd.f32 %v395, %v498
        %v505 = vadd.f32 %v397, %v500
        %v506 = vld [vmem:[%s2] sm:$0x3]
        %v508 = vlaneseq
        %v509 = vshrl.u32 %v508, 7
        %v510 = vsub.s32 0, %v509
        %v511 = vrot.slane %v506, %v510
        %v512 = vlaneseq
        %v513 = vshrl.u32 %v512, 7
        %v514 = vsub.s32 1, %v513
        %v515 = vrot.slane %v506, %v514
        %v518 = vadd.f32 %v502, %v511
        %v519 = vadd.f32 %v503, %v515
        %v520 = vadd.f32 %v504, %v511
        %v521 = vadd.f32 %v505, %v515
        %v522 = vmax.f32 %v518, 0.0
        %v523 = vmax.f32 %v519, 0.0
        %v524 = vmax.f32 %v520, 0.0
        %v525 = vmax.f32 %v521, 0.0
        %v526 = vpack.c.bf16 %v524, %v522
        %v527 = vpack.c.bf16 %v525, %v523
        %v530 = vunpack.c.l.b16 %v526
        %v531 = vunpack.c.l.b16 %v527
        %v532 = vunpack.c.h.b16 %v526
        %v533 = vunpack.c.h.b16 %v527
        %v534 = vpack.c.b16 %v531, %v530
        %v535 = vpack.c.b16 %v533, %v532
        %538 = vst [vmem:[%s178] sm:$0xff] %v534
        %539 = vst [vmem:[%s178 + $0x8] sm:$0xff] %v535
        %s540 = sand.u32 %s94, 1
        %s541 = scalar_lea.sflag [#allocation4], %s540
        %s542 = sand.u32 %s94, 1
        %s543 = smul.addr %s542, 16
        %s544 = scalar_lea.vmem [#allocation5], %s543
        // Predicated region
        $region37: #{tpu_custom_call.1} parent=31 // pred_check
          %p545 = pneg %p104
        $region38: #{tpu_custom_call.1} parent=31 // pred_check_branch
          %547 = sbr.rel (%p545) target = $region40
        $region39: #{tpu_custom_call.1} parent=31 // pred_region
          %s549 = ssub.s32 256, 256
          %550 = vsyncadd %s541, %s549
          %s551 = smul.addr %s18, 4
          %s552 = smul.addr %s551, 64
          %s553 = scalar_lea.hbm %s3, %s552
          %s554 = sshll.u32 %s544, 4
          %s555 = int_to_ptr.vmem [resolvable:$true] %s554
          %560 = dma.vmem_to_hbm [thread:$0]  %s555, 256, %s553, %s541, 128, 128, 8
        $region40: #{tpu_custom_call.1} parent=31 // pred_fallthru
          _
      $region32: #{tpu_custom_call.1} parent=5 // pred_fallthru
        _
      %p561 = scmp.le.s32.totalorder 2, %s13
      // Predicated region
      $region41: #{tpu_custom_call.1} parent=5 // pred_check
        %p562 = pneg %p561
      $region42: #{tpu_custom_call.1} parent=5 // pred_check_branch
        %564 = sbr.rel (%p562) target = $region44
      $region43: #{tpu_custom_call.1} parent=5 // pred_region
        %s565 = ssub.s32 %s13, 2
        // Predicated region
        $region45: #{tpu_custom_call.1} parent=43 // pred_check
          %p566 = pneg %p110
        $region46: #{tpu_custom_call.1} parent=43 // pred_check_branch
          %568 = sbr.rel (%p566) target = $region48
        $region47: #{tpu_custom_call.1} parent=43 // pred_region
          %s569 = sand.u32 %s95, 1
          %s570 = scalar_lea.sflag [#allocation4], %s569
          %s571 = sand.u32 %s95, 1
          %s572 = smul.addr %s571, 16
          %s573 = scalar_lea.vmem [#allocation5], %s572
          %574 = dma.done %s570, 256
        $region48: #{tpu_custom_call.1} parent=43 // pred_fallthru
          _
      $region44: #{tpu_custom_call.1} parent=5 // pred_fallthru
        _
    $region6: #{tpu_custom_call.1} parent=1 // loop_footer
      %s17 = sadd.s32 1, %s13
    $region7: #{tpu_custom_call.1} parent=1 // loop_footer_branch
      %12 = sbr.rel target = $region3
    $region8: #{tpu_custom_call.1} parent=1 // loop_exit
      _
    %575 = vsyncpa [#allocation3], 1
    %s576 = scalar_lea.sflag [#allocation3], 1
    %577 = vsyncpa %s576, 1
    %578 = vsyncpa [#allocation4], 1
    %s579 = scalar_lea.sflag [#allocation4], 1
    %580 = vsyncpa %s579, 1

</llo_original>
